<compile_context>
chip_gen: v7x
topology: tpu7x:2x2x1
jax: 0.10.0
libtpu: 0.0.40
codegen_flags: <defaults>
</compile_context>

<pallas_src>
import jax
import jax.numpy as jnp
from jax import lax
from jax.experimental import pallas as pl
from jax.experimental.pallas import tpu as pltpu


def _fused_conv_inorm_relu_kernel(w_ref, b_ref, p_ref, o_ref):
    # w_ref: (Cout, K)      K = Cin*9, resident across the batch grid
    # b_ref: (Cout, 1)      conv bias (cancels under InstanceNorm; kept for fidelity)
    # p_ref: (1, K, HW)     im2col patches for one batch element, HW = Ho*Wo
    # o_ref: (1, Cout, HW)  normalized + ReLU'd pre-upsample map
    acc = jnp.dot(w_ref[...], p_ref[0], preferred_element_type=jnp.float32)
    acc = acc + b_ref[...]

    hw = acc.shape[-1]
    inv_hw = jnp.float32(1.0 / hw)
    # Single pass: mean and E[x^2] together; biased variance matches
    # nn.InstanceNorm2d (divide by HW, no Bessel correction).
    mean = jnp.sum(acc, axis=-1, keepdims=True) * inv_hw
    ex2 = jnp.sum(acc * acc, axis=-1, keepdims=True) * inv_hw
    var = jnp.maximum(ex2 - mean * mean, 0.0)

    y = (acc - mean) * lax.rsqrt(var + 1e-5)          # rsqrt -> EUP
    o_ref[0] = jnp.maximum(y, 0.0).astype(o_ref.dtype)


def upsample_forward(x, weight, bias, scale_factor):
    """x: (N, Cin, H, W) f32; weight: (Cout, Cin, 3, 3); bias: (Cout,)."""
    N, Cin, H, W = x.shape
    Cout = weight.shape[0]
    Ho = (H + 2 - 3) // 2 + 1
    Wo = (W + 2 - 3) // 2 + 1
    HW = Ho * Wo
    s = int(scale_factor)

    # --- glue: im2col at output (stride-2) resolution -> (N, Cin*9, Ho*Wo) ---
    x_pad = jnp.pad(x, ((0, 0), (0, 0), (1, 1), (1, 1)))
    cols = []
    for kh in range(3):
        for kw in range(3):
            cols.append(x_pad[:, :,
                              kh:kh + 2 * (Ho - 1) + 1:2,
                              kw:kw + 2 * (Wo - 1) + 1:2])
    patches = jnp.stack(cols, axis=2).reshape(N, Cin * 9, HW)
    w2 = weight.reshape(Cout, Cin * 9).astype(jnp.float32)   # index ci*9+kh*3+kw
    b2 = bias.reshape(Cout, 1).astype(jnp.float32)

    # --- fused Pallas kernel: conv + bias + InstanceNorm + ReLU --------------
    # NOTE: one batch element's patches (K, HW) must fit VMEM; for very large
    # HRNet resolutions add an HW-tile grid axis with a two-pass norm.
    norm = pl.pallas_call(
        _fused_conv_inorm_relu_kernel,
        out_shape=jax.ShapeDtypeStruct((N, Cout, HW), x.dtype),
        grid=(N,),
        in_specs=[
            pl.BlockSpec((Cout, Cin * 9), lambda n: (0, 0)),   # resident weight
            pl.BlockSpec((Cout, 1), lambda n: (0, 0)),         # resident bias
            pl.BlockSpec((1, Cin * 9, HW), lambda n: (n, 0, 0)),
        ],
        out_specs=pl.BlockSpec((1, Cout, HW), lambda n: (n, 0, 0)),
        compiler_params=pltpu.CompilerParams(
            dimension_semantics=("parallel",)),
    )(w2, b2, patches)

    # --- glue: nearest-neighbor upsample of the already-normalized map ------
    # Exact because duplication leaves per-channel mean/var unchanged and ReLU
    # commutes with duplication; the large tensor is written once, read never.
    norm = norm.reshape(N, Cout, Ho, Wo)
    up = jnp.repeat(jnp.repeat(norm, s, axis=2), s, axis=3)
    return up


def _reference(x, weight, bias, scale_factor):
    s = int(scale_factor)
    conv = lax.conv_general_dilated(
        x, weight, window_strides=(2, 2), padding=((1, 1), (1, 1)),
        dimension_numbers=("NCHW", "OIHW", "NCHW"),
        precision=lax.Precision.HIGHEST) + bias[None, :, None, None]
    up = jnp.repeat(jnp.repeat(conv, s, axis=2), s, axis=3)
    mean = up.mean(axis=(2, 3), keepdims=True)
    var = ((up - mean) ** 2).mean(axis=(2, 3), keepdims=True)
    y = (up - mean) / jnp.sqrt(var + 1e-5)
    return jnp.maximum(y, 0.0)


if __name__ == "__main__":
    N, Cin, Cout, H, W = 2, 4, 8, 16, 16
    scale_factor = 2

    key = jax.random.PRNGKey(0)
    kx, kw, kb = jax.random.split(key, 3)
    x = jax.random.normal(kx, (N, Cin, H, W), dtype=jnp.float32)
    weight = jax.random.normal(kw, (Cout, Cin, 3, 3), dtype=jnp.float32) * 0.1
    bias = jax.random.normal(kb, (Cout,), dtype=jnp.float32) * 0.1

    out = jax.block_until_ready(upsample_forward(x, weight, bias, scale_factor))

    ref = _reference(x, weight, bias, scale_factor)
    assert out.shape == (N, Cout, (H // 2) * scale_factor, (W // 2) * scale_factor)
    assert jnp.allclose(out, ref, rtol=1e-3, atol=1e-3), (
        float(jnp.max(jnp.abs(out - ref))))

    print("KERNEL_OK")
</pallas_src>

<mosaic_0001>
module attributes {stable_mosaic.version = 11 : i64} {
  func.func @_fused_conv_inorm_relu_kernel(%arg0: i32, %arg1: memref<8x36xf32, #tpu.memory_space<vmem>>, %arg2: memref<8x1xf32, #tpu.memory_space<vmem>>, %arg3: memref<1x36x64xf32, #tpu.memory_space<vmem>>, %arg4: memref<1x8x64xf32, #tpu.memory_space<vmem>>) attributes {dimension_semantics = [#tpu.dimension_semantics<parallel>], iteration_bounds = array<i64: 2>, scalar_prefetch = 0 : i64, scratch_operands = 0 : i64, tpu.core_type = #tpu.core_type<tc>, window_params = [{pipeline_mode = #tpu.pipeline_mode<synchronous>, transform_indices = @transform_0, window_bounds = array<i64: 8, 36>}, {pipeline_mode = #tpu.pipeline_mode<synchronous>, transform_indices = @transform_1, window_bounds = array<i64: 8, 1>}, {transform_indices = @transform_2, window_bounds = array<i64: 1, 36, 64>}, {transform_indices = @transform_3, window_bounds = array<i64: 1, 8, 64>}]} {
    %c0 = arith.constant 0 : index
    %c0_0 = arith.constant 0 : index
    %0 = vector.load %arg1[%c0, %c0_0] : memref<8x36xf32, #tpu.memory_space<vmem>>, vector<8x36xf32>
    %c0_1 = arith.constant 0 : index
    %c0_2 = arith.constant 0 : index
    %c0_3 = arith.constant 0 : index
    %1 = vector.load %arg3[%c0_1, %c0_2, %c0_3] : memref<1x36x64xf32, #tpu.memory_space<vmem>>, vector<1x36x64xf32>
    %2 = vector.shape_cast %1 : vector<1x36x64xf32> to vector<36x64xf32>
    %cst = arith.constant dense<0.000000e+00> : vector<8x64xf32>
    %3 = tpu.matmul %0, %2, %cst {dimension_numbers = #tpu.dot_dimension_numbers<[1], [0], [0], [1], [0, 0, 1, 1], [], []>} : vector<8x36xf32>, vector<36x64xf32>, vector<8x64xf32> -> vector<8x64xf32>
    %c0_4 = arith.constant 0 : index
    %c0_5 = arith.constant 0 : index
    %4 = vector.load %arg2[%c0_4, %c0_5] : memref<8x1xf32, #tpu.memory_space<vmem>>, vector<8x1xf32>
    %5 = vector.broadcast %4 : vector<8x1xf32> to vector<8x64xf32>
    %6 = arith.addf %3, %5 : vector<8x64xf32>
    %cst_6 = arith.constant dense<0.000000e+00> : vector<8xf32>
    %7 = vector.multi_reduction <add>, %6, %cst_6 [1] : vector<8x64xf32> to vector<8xf32>
    %8 = vector.shape_cast %7 : vector<8xf32> to vector<8x1xf32>
    %cst_7 = arith.constant 1.562500e-02 : f32
    %9 = vector.broadcast %cst_7 : f32 to vector<8x1xf32>
    %10 = arith.mulf %8, %9 : vector<8x1xf32>
    %11 = arith.mulf %6, %6 : vector<8x64xf32>
    %cst_8 = arith.constant dense<0.000000e+00> : vector<8xf32>
    %12 = vector.multi_reduction <add>, %11, %cst_8 [1] : vector<8x64xf32> to vector<8xf32>
    %13 = vector.shape_cast %12 : vector<8xf32> to vector<8x1xf32>
    %cst_9 = arith.constant 1.562500e-02 : f32
    %14 = vector.broadcast %cst_9 : f32 to vector<8x1xf32>
    %15 = arith.mulf %13, %14 : vector<8x1xf32>
    %16 = arith.mulf %10, %10 : vector<8x1xf32>
    %17 = arith.subf %15, %16 : vector<8x1xf32>
    %cst_10 = arith.constant 0.000000e+00 : f32
    %18 = vector.broadcast %cst_10 : f32 to vector<8x1xf32>
    %19 = arith.maximumf %17, %18 : vector<8x1xf32>
    %20 = vector.broadcast %10 : vector<8x1xf32> to vector<8x64xf32>
    %21 = arith.subf %6, %20 : vector<8x64xf32>
    %cst_11 = arith.constant 9.99999974E-6 : f32
    %22 = vector.broadcast %cst_11 : f32 to vector<8x1xf32>
    %23 = arith.addf %19, %22 : vector<8x1xf32>
    %24 = math.rsqrt %23 : vector<8x1xf32>
    %25 = vector.broadcast %24 : vector<8x1xf32> to vector<8x64xf32>
    %26 = arith.mulf %21, %25 : vector<8x64xf32>
    %cst_12 = arith.constant 0.000000e+00 : f32
    %27 = vector.broadcast %cst_12 : f32 to vector<8x64xf32>
    %28 = arith.maximumf %26, %27 : vector<8x64xf32>
    %c0_13 = arith.constant 0 : index
    %c0_14 = arith.constant 0 : index
    %c0_15 = arith.constant 0 : index
    %29 = vector.load %arg4[%c0_13, %c0_14, %c0_15] : memref<1x8x64xf32, #tpu.memory_space<vmem>>, vector<1x8x64xf32>
    %30 = vector.shape_cast %29 : vector<1x8x64xf32> to vector<8x64xf32>
    %31 = vector.shape_cast %28 : vector<8x64xf32> to vector<1x8x64xf32>
    tpu.vector_store %arg4[%c0_13, %c0_14, %c0_15], %31 {strides = array<i32>} : memref<1x8x64xf32, #tpu.memory_space<vmem>>, vector<1x8x64xf32>,
    return
  }
  func.func @transform_0(%arg0: i32) -> (i32, i32) {
    %c0_i32 = arith.constant 0 : i32
    %c0_i32_0 = arith.constant 0 : i32
    %c0_i32_1 = arith.constant 0 : i32
    return %c0_i32, %c0_i32_0 : i32, i32
  }
  func.func @transform_1(%arg0: i32) -> (i32, i32) {
    %c0_i32 = arith.constant 0 : i32
    %c0_i32_0 = arith.constant 0 : i32
    %c0_i32_1 = arith.constant 0 : i32
    return %c0_i32, %c0_i32_0 : i32, i32
  }
  func.func @transform_2(%arg0: i32) -> (i32, i32, i32) {
    %c0_i32 = arith.constant 0 : i32
    %c0_i32_0 = arith.constant 0 : i32
    %c0_i32_1 = arith.constant 0 : i32
    return %arg0, %c0_i32, %c0_i32_0 : i32, i32, i32
  }
  func.func @transform_3(%arg0: i32) -> (i32, i32, i32) {
    %c0_i32 = arith.constant 0 : i32
    %c0_i32_0 = arith.constant 0 : i32
    %c0_i32_1 = arith.constant 0 : i32
    return %arg0, %c0_i32, %c0_i32_0 : i32, i32, i32
  }
}

</mosaic_0001>

<llo_original>
// kernel: tpu_custom_call.1
$region0: #{tpu_custom_call.1}
  #allocation0 [shape = 'u32[]', space=smem, size = 0x4, offset = 0x4, fixed_abs, tag = 'smem constant byte address 0x4 - core index']
  #allocation1 [shape = 'u32[144,128]{1,0:T(1,128)}', space=vmem, size = 0x12000, scoped, tag = 'internal scratch']
  %s0 = inlined_call_operand.vmem [shape: f32[8,36], index: 0, kind: input, shape index: {}]
  %s1 = inlined_call_operand.vmem [shape: f32[8,1], index: 1, kind: input, shape index: {}]
  %s2 = inlined_call_operand.vmem [shape: f32[2,36,64], index: 2, kind: input, shape index: {}]
  %s3 = inlined_call_operand.hbm [shape: f32[2,8,64], index: 3, kind: output, shape index: {}]
  %s4 = sld [smem:[#allocation0]]
  $region45: #{tpu_custom_call.1} parent=0
    _
  %s6 = ssub.s32 1, %s4
  %s7 = scalar_select 0, %s6, %s4
  $region1: #{tpu_custom_call.1} parent=0
    #allocation2 [shape = 'u8[8192]{0}', space=vmem, size = 0x2000, scoped, tag = 'output window, operand 0']
    #allocation3 [shape = 's32[2]{0}', space=sflag, size = 0x8, scoped, tag = 'scoped memory for tpu_custom_call.1']
    %8 = vsyncpa [#allocation3], 0
    %s9 = scalar_lea.sflag [#allocation3], 1
    %10 = vsyncpa %s9, 0
    loop: start=0, step=1, limit=4
    $region2: #{tpu_custom_call.1} parent=1 // loop_pre_header
      _
    $region3: #{tpu_custom_call.1} parent=1 // loop_header
      %s12 = sphi 0, %s16
      %p13 = scmp.ge.s32.totalorder %s12, 4
      %s20 = sphi 0, %s20
      %s22 = sphi 0, %s20
      %s23 = sphi 0, %s22
      %s37 = sphi 0, %s23
      %s41 = sphi 0, %s41
      %s43 = sphi 0, %s41
      %s44 = sphi 0, %s43
      %s58 = sphi 0, %s44
      %s64 = sphi 0, %s66
      %s67 = sphi 0, %s64
      %s68 = sphi 0, %s67
      %s84 = sphi 0, %s68
      %s90 = sphi 0, %s92
      %s93 = sphi 0, %s90
      %s94 = sphi 0, %s93
      %s110 = sphi 0, %s94
    $region4: #{tpu_custom_call.1} parent=1 // loop_header_branch
      %15 = sbr.rel (%p13) target = $region8
    $region5: #{tpu_custom_call.1} parent=1 // loop_body
      %s17 = ssub.s32 %s12, 1
      %s18 = ssub.s32 %s12, 2
      %s19 = sadd.s32 %s12, 1
      %s21 = sadd.s32 %s20, 1
      %p24 = scmp.eq.s32.totalorder %s12, 1
      %p25 = scmp.ne.s32.totalorder %s20, %s22
      %p26 = scmp.eq.s32.totalorder %s12, 0
      %p27 = por %p25, %p26
      %p28 = scmp.ne.s32.totalorder %s20, %s22
      %p29 = scmp.eq.s32.totalorder %s17, 1
      %p30 = por %p28, %p29
      %p31 = scmp.ne.s32.totalorder %s22, %s23
      %p32 = scmp.eq.s32.totalorder %s17, 0
      %p33 = por %p31, %p32
      %p34 = scmp.ne.s32.totalorder %s22, %s23
      %p35 = scmp.eq.s32.totalorder %s18, 1
      %p36 = por %p34, %p35
      %p38 = scmp.ne.s32.totalorder %s23, %s37
      %p39 = scmp.eq.s32.totalorder %s18, 0
      %p40 = por %p38, %p39
      %s42 = sadd.s32 %s41, 1
      %p45 = scmp.eq.s32.totalorder %s12, 1
      %p46 = scmp.ne.s32.totalorder %s41, %s43
      %p47 = scmp.eq.s32.totalorder %s12, 0
      %p48 = por %p46, %p47
      %p49 = scmp.ne.s32.totalorder %s41, %s43
      %p50 = scmp.eq.s32.totalorder %s17, 1
      %p51 = por %p49, %p50
      %p52 = scmp.ne.s32.totalorder %s43, %s44
      %p53 = scmp.eq.s32.totalorder %s17, 0
      %p54 = por %p52, %p53
      %p55 = scmp.ne.s32.totalorder %s43, %s44
      %p56 = scmp.eq.s32.totalorder %s18, 1
      %p57 = por %p55, %p56
      %p59 = scmp.ne.s32.totalorder %s44, %s58
      %p60 = scmp.eq.s32.totalorder %s18, 0
      %p61 = por %p59, %p60
      %s62 = ssub.s32 %s12, %s19
      %p63 = scmp.eq.s32.totalorder %s62, 0
      %s65 = sadd.s32 %s64, 1
      %s66 = scalar_select %p63, %s64, %s65
      %p69 = pneg %p63
      %p70 = scmp.eq.s32.totalorder %s12, 1
      %p71 = por %p69, %p70
      %p72 = scmp.ne.s32.totalorder %s64, %s67
      %p73 = scmp.eq.s32.totalorder %s12, 0
      %p74 = por %p72, %p73
      %p75 = scmp.ne.s32.totalorder %s64, %s67
      %p76 = scmp.eq.s32.totalorder %s17, 1
      %p77 = por %p75, %p76
      %p78 = scmp.ne.s32.totalorder %s67, %s68
      %p79 = scmp.eq.s32.totalorder %s17, 0
      %p80 = por %p78, %p79
      %p81 = scmp.ne.s32.totalorder %s67, %s68
      %p82 = scmp.eq.s32.totalorder %s18, 1
      %p83 = por %p81, %p82
      %p85 = scmp.ne.s32.totalorder %s68, %s84
      %p86 = scmp.eq.s32.totalorder %s18, 0
      %p87 = por %p85, %p86
      %s88 = ssub.s32 %s12, %s19
      %p89 = scmp.eq.s32.totalorder %s88, 0
      %s91 = sadd.s32 %s90, 1
      %s92 = scalar_select %p89, %s90, %s91
      %p95 = pneg %p89
      %p96 = scmp.eq.s32.totalorder %s12, 1
      %p97 = por %p95, %p96
      %p98 = scmp.ne.s32.totalorder %s90, %s93
      %p99 = scmp.eq.s32.totalorder %s12, 0
      %p100 = por %p98, %p99
      %p101 = scmp.ne.s32.totalorder %s90, %s93
      %p102 = scmp.eq.s32.totalorder %s17, 1
      %p103 = por %p101, %p102
      %p104 = scmp.ne.s32.totalorder %s93, %s94
      %p105 = scmp.eq.s32.totalorder %s17, 0
      %p106 = por %p104, %p105
      %p107 = scmp.ne.s32.totalorder %s93, %s94
      %p108 = scmp.eq.s32.totalorder %s18, 1
      %p109 = por %p107, %p108
      %p111 = scmp.ne.s32.totalorder %s94, %s110
      %p112 = scmp.eq.s32.totalorder %s18, 0
      %p113 = por %p111, %p112
      %p114 = scmp.le.s32.totalorder 1, %s12
      %p115 = scmp.lt.s32.totalorder %s12, 3
      %p116 = pnand %p114, %p115
      %p117 = pneg %p116
      // Predicated region
      $region9: #{tpu_custom_call.1} parent=5 // pred_check
        _
      $region10: #{tpu_custom_call.1} parent=5 // pred_check_branch
        %119 = sbr.rel (%p116) target = $region12
      $region11: #{tpu_custom_call.1} parent=5 // pred_region
        %s120 = ssub.s32 %s12, 1
        // Predicated region
        $region13: #{tpu_custom_call.1} parent=11 // pred_check
          %p121 = pneg %p33
        $region14: #{tpu_custom_call.1} parent=11 // pred_check_branch
          %123 = sbr.rel (%p121) target = $region16
        $region15: #{tpu_custom_call.1} parent=11 // pred_region
          _
        $region16: #{tpu_custom_call.1} parent=11 // pred_fallthru
          _
        // Predicated region
        $region17: #{tpu_custom_call.1} parent=11 // pred_check
          %p124 = pneg %p54
        $region18: #{tpu_custom_call.1} parent=11 // pred_check_branch
          %126 = sbr.rel (%p124) target = $region20
        $region19: #{tpu_custom_call.1} parent=11 // pred_region
          _
        $region20: #{tpu_custom_call.1} parent=11 // pred_fallthru
          _
      $region12: #{tpu_custom_call.1} parent=5 // pred_fallthru
        _
      %p127 = scmp.lt.s32.totalorder %s12, 2
      // Predicated region
      $region21: #{tpu_custom_call.1} parent=5 // pred_check
        %p128 = pneg %p127
      $region22: #{tpu_custom_call.1} parent=5 // pred_check_branch
        %130 = sbr.rel (%p128) target = $region24
      $region23: #{tpu_custom_call.1} parent=5 // pred_region
        // Predicated region
        $region25: #{tpu_custom_call.1} parent=23 // pred_check
          %p131 = pneg %p74
        $region26: #{tpu_custom_call.1} parent=23 // pred_check_branch
          %133 = sbr.rel (%p131) target = $region28
        $region27: #{tpu_custom_call.1} parent=23 // pred_region
          %p134 = scmp.lt.s32.totalorder %s12, 1
          %s135 = scalar_select %p134, %s12, 1
          %s136 = smul.addr %s135, 5
          %s137 = smul.addr %s136, 8
          %s138 = scalar_lea.vmem %s2, %s137
        $region28: #{tpu_custom_call.1} parent=23 // pred_fallthru
          _
      $region24: #{tpu_custom_call.1} parent=5 // pred_fallthru
        _
      %p139 = scmp.le.s32.totalorder 1, %s12
      %p140 = scmp.lt.s32.totalorder %s12, 3
      %p141 = pnand %p139, %p140
      %p142 = pneg %p141
      // Predicated region
      $region29: #{tpu_custom_call.1} parent=5 // pred_check
        _
      $region30: #{tpu_custom_call.1} parent=5 // pred_check_branch
        %144 = sbr.rel (%p141) target = $region32
      $region31: #{tpu_custom_call.1} parent=5 // pred_region
        %s145 = ssub.s32 %s12, 1
        %p146 = pneg %p33
        %p147 = pneg %p30
        %p148 = pneg %p54
        %p149 = pneg %p51
        %p150 = scmp.lt.s32.totalorder %s17, 1
        %s151 = scalar_select %p150, %s17, 1
        %s152 = smul.addr %s151, 5
        %s153 = smul.addr %s152, 8
        %s154 = scalar_lea.vmem %s2, %s153
        %p155 = pneg %p80
        %p156 = pneg %p77
        %p157 = pneg %p106
        %p158 = pneg %p103
        %s159 = sand.u32 %s93, 1
        %s160 = scalar_lea.sflag [#allocation3], %s159
        %s161 = sand.u32 %s93, 1
        %s162 = smul.addr %s161, 8
        %s163 = scalar_lea.vmem [#allocation2], %s162
        %p164 = scmp.lt.s32.totalorder %s17, 1
        %s165 = scalar_select %p164, %s17, 1
        %s166 = smul.addr %s165, 5
        %s167 = smul.addr %s166, 8
        %s168 = scalar_lea.vmem %s2, %s167
        %v169 = vld [vmem:[%s0] sm:$0xff]
        %v170 = vld [vmem:[%s168] sm:$0xff]
        %v171 = vld [vmem:[%s168 + $0x8] sm:$0xff]
        %v172 = vld [vmem:[%s168 + $0x10] sm:$0xff]
        %v173 = vld [vmem:[%s168 + $0x18] sm:$0xff]
        %v174 = vld [vmem:[%s168 + $0x20] sm:$0xf]
        %v175 = vld [vmem:[%s1] sm:$0xff]
        %177 = vset.pattern.permute.xlu0 0
        %178 = vperm.xlu0 %177, %v175
        %v179 = vpop.permute.xlu0 %178
        %vm181 = vcmask 293888
        %v183 = vsel %vm181, %v169, 0
        %vm185 = vcmask 1043456
        %v187 = vsel %vm185, %v174, 0
        %189 = vmatprep.subr.mxu0 0.0
        %190 = vmatpush1.msra.mxu0 %v170
        %191 = vmatprep.subr.mxu0 0.0
        %192 = vmatpush1.msra.mxu0 %v171
        %193 = vmatprep.subr.mxu0 0.0
        %194 = vmatpush1.msra.mxu0 %v172
        %195 = vmatprep.subr.mxu0 0.0
        %196 = vmatpush1.msra.mxu0 %v173
        %197 = vmatprep.subr.mxu0 0.0
        %198 = vmatpush1.msra.mxu0 %v187
        %199 = vmatprep.subr.mxu0 0.0
        %200 = vmatpush1.msra.mxu0 0.0
        %201 = vmatprep.subr.mxu0 0.0
        %202 = vmatpush1.msra.mxu0 0.0
        %203 = vmatprep.subr.mxu0 0.0
        %204 = vmatpush1.msra.mxu0 0.0
        %205 = vmatprep.subr.mxu0 0.0
        %206 = vmatpush1.msra.mxu0 0.0
        %207 = vmatprep.subr.mxu0 0.0
        %208 = vmatpush1.msra.mxu0 0.0
        %209 = vmatprep.subr.mxu0 0.0
        %210 = vmatpush1.msra.mxu0 0.0
        %211 = vmatprep.subr.mxu0 0.0
        %212 = vmatpush1.msra.mxu0 0.0
        %213 = vmatprep.subr.mxu0 0.0
        %214 = vmatpush1.msra.mxu0 0.0
        %215 = vmatprep.subr.mxu0 0.0
        %216 = vmatpush1.msra.mxu0 0.0
        %217 = vmatprep.subr.mxu0 0.0
        %218 = vmatpush1.msra.mxu0 0.0
        %219 = vmatprep.subr.mxu0 0.0
        %220 = vmatpush1.msra.mxu0 0.0
        %221 = vmatprep.subr.mxu0 0.0
        %222 = vmatpush1.msra.mxu0 0.0
        %223 = vmatprep.subr.mxu0 0.0
        %224 = vmatpush1.msra.mxu0 0.0
        %225 = vmatprep.subr.mxu0 0.0
        %226 = vmatpush1.msra.mxu0 0.0
        %227 = vmatprep.subr.mxu0 0.0
        %228 = vmatpush1.msra.mxu0 0.0
        %229 = vmatprep.subr.mxu0 0.0
        %230 = vmatpush1.msra.mxu0 0.0
        %231 = vmatprep.subr.mxu0 0.0
        %232 = vmatpush1.msra.mxu0 0.0
        %233 = vmatprep.subr.mxu0 0.0
        %234 = vmatpush1.msra.mxu0 0.0
        %235 = vmatprep.subr.mxu0 0.0
        %236 = vmatpush1.msra.mxu0 0.0
        %237 = vmatprep.subr.mxu0 0.0
        %238 = vmatpush1.msra.mxu0 0.0
        %239 = vmatprep.subr.mxu0 0.0
        %240 = vmatpush1.msra.mxu0 0.0
        %241 = vmatprep.subr.mxu0 0.0
        %242 = vmatpush1.msra.mxu0 0.0
        %243 = vmatprep.subr.mxu0 0.0
        %244 = vmatpush1.msra.mxu0 0.0
        %245 = vmatprep.subr.mxu0 0.0
        %246 = vmatpush1.msra.mxu0 0.0
        %247 = vmatprep.subr.mxu0 0.0
        %248 = vmatpush1.msra.mxu0 0.0
        %249 = vmatprep.subr.mxu0 0.0
        %250 = vmatpush1.msra.mxu0 0.0
        %251 = vmatprep.subr.mxu0 0.0
        %252 = vmatpush1.msra.mxu0 0.0
        %253 = vmatprep.mubr.f32.mxu0 0.0
        %254 = vmatmul.mubr.f32.gmra.mrb[0].mxu0 %v183
        %v255 = vpop.f32.mrb[0].mxu0
        %v256 = vadd.f32 %v179, %v255
        %v257 = vpop.f32.mrb[0].mxu0
        %258 = vdwg.mxu0
        %vm259 = vcmask 523264
        %v260 = vsel %vm259, %v256, 0.0
        %261 = vadd.xlane.f32.xlu0 %v260
        %v262 = vpop.xlane.xlu0 %261
        %v263 = vmul.f32 %v262, 0.015625
        %v264 = vmul.f32 %v256, %v256
        %v265 = vsel %vm259, %v264, 0.0
        %266 = vadd.xlane.f32.xlu0 %v265
        %v267 = vpop.xlane.xlu0 %266
        %v268 = vmul.f32 %v267, 0.015625
        %v269 = vmul.f32 %v263, %v263
        %v270 = vsub.f32 %v268, %v269
        %v271 = vmax.f32 %v270, 0.0
        %v272 = vsub.f32 %v256, %v263
        %v273 = vadd.f32 %v271, 1e-05
        %v274 = vrsqrt.pop %v273
        %v275 = vmul.f32 %v272, %v274
        %v276 = vmax.f32 %v275, 0.0
        %277 = vst.msk [vmem:[%s163] sm:$0xff] %vm259, %v276
        %s278 = sand.u32 %s93, 1
        %s279 = scalar_lea.sflag [#allocation3], %s278
        %s280 = sand.u32 %s93, 1
        %s281 = smul.addr %s280, 8
        %s282 = scalar_lea.vmem [#allocation2], %s281
        // Predicated region
        $region33: #{tpu_custom_call.1} parent=31 // pred_check
          %p283 = pneg %p103
        $region34: #{tpu_custom_call.1} parent=31 // pred_check_branch
          %285 = sbr.rel (%p283) target = $region36
        $region35: #{tpu_custom_call.1} parent=31 // pred_region
          %s287 = ssub.s32 128, 128
          %288 = vsyncadd %s279, %s287
          %s289 = smul.addr %s17, 128
          %s290 = scalar_lea.hbm %s3, %s289
          %s292 = sshll.u32 %s282, 4
          %s293 = int_to_ptr.vmem [resolvable:$true] %s292
          %295 = dma.vmem_to_hbm [thread:$0]  %s293, 128, %s290, %s279
        $region36: #{tpu_custom_call.1} parent=31 // pred_fallthru
          _
      $region32: #{tpu_custom_call.1} parent=5 // pred_fallthru
        _
      %p296 = scmp.le.s32.totalorder 2, %s12
      // Predicated region
      $region37: #{tpu_custom_call.1} parent=5 // pred_check
        %p297 = pneg %p296
      $region38: #{tpu_custom_call.1} parent=5 // pred_check_branch
        %299 = sbr.rel (%p297) target = $region40
      $region39: #{tpu_custom_call.1} parent=5 // pred_region
        %s300 = ssub.s32 %s12, 2
        // Predicated region
        $region41: #{tpu_custom_call.1} parent=39 // pred_check
          %p301 = pneg %p109
        $region42: #{tpu_custom_call.1} parent=39 // pred_check_branch
          %303 = sbr.rel (%p301) target = $region44
        $region43: #{tpu_custom_call.1} parent=39 // pred_region
          %s304 = sand.u32 %s94, 1
          %s305 = scalar_lea.sflag [#allocation3], %s304
          %s306 = sand.u32 %s94, 1
          %s307 = smul.addr %s306, 8
          %s308 = scalar_lea.vmem [#allocation2], %s307
          %309 = dma.done %s305, 128
        $region44: #{tpu_custom_call.1} parent=39 // pred_fallthru
          _
      $region40: #{tpu_custom_call.1} parent=5 // pred_fallthru
        _
    $region6: #{tpu_custom_call.1} parent=1 // loop_footer
      %s16 = sadd.s32 1, %s12
    $region7: #{tpu_custom_call.1} parent=1 // loop_footer_branch
      %11 = sbr.rel target = $region3
    $region8: #{tpu_custom_call.1} parent=1 // loop_exit
      _
    %310 = vsyncpa [#allocation3], 1
    %s311 = scalar_lea.sflag [#allocation3], 1
    %312 = vsyncpa %s311, 1

</llo_original>
